<compile_context>
chip_gen: v6e
topology: v6e:2x2x1
jax: 0.10.0
libtpu: 0.0.40
codegen_flags: <defaults>
</compile_context>

<pallas_src>
import jax
import jax.numpy as jnp
from jax.experimental import pallas as pl
from jax.experimental.pallas import tpu as pltpu


_IN_ROWS = 30   # [o1(5) | o2(5) | o3(5) | a1(5) | a2(5) | a3(5)] on sublanes
_OUT_ROWS = 22  # [loss(11) | out(11)] on sublanes


def _l1_test_loss_kernel(x_ref, y_ref):
    # x: (30, T) lane-dense packed inputs.
    #   rows  0: 5  -> outd1 features 0..4
    #   rows  5:10  -> outd2 features 0..4
    #   rows 10:15  -> outd3 features 0..4
    #   rows 15:20  -> d1annot features 0..4
    #   rows 20:25  -> d2annot features 0..4
    #   rows 25:30  -> d3annot features 0..4
    x = x_ref[...]

    # Full |annot - pred| block in a single VPU op:
    #   dloss[0:5]  = d1loss, dloss[5:10] = d2loss, dloss[10:15] = d3loss
    dloss = jnp.abs(x[15:30, :] - x[0:15, :])

    # area = mean over the three heads of features 3:5  -> (2, T)
    area = (x[3:5, :] + x[8:10, :] + x[13:15, :]) * (1.0 / 3.0)

    # ---- loss (rows 0..10): [arealoss(2) | dimsloss d1,d2,d3 (3) | rwtloss(6)]
    y_ref[0:2, :] = jnp.abs(area - x[18:20, :])   # arealoss = |area - a1[:,3:5]|
    y_ref[2:3, :] = dloss[0:1, :]                 # d1loss[:,0]
    y_ref[3:4, :] = dloss[5:6, :]                 # d2loss[:,0]
    y_ref[4:5, :] = dloss[10:11, :]               # d3loss[:,0]
    y_ref[5:7, :] = dloss[1:3, :]                 # d1loss[:,1:3]
    y_ref[7:9, :] = dloss[6:8, :]                 # d2loss[:,1:3]
    y_ref[9:11, :] = dloss[11:13, :]              # d3loss[:,1:3]

    # ---- out (rows 11..21): [area(2) | dims d3,d1,d2 (3) | rwt(6)]
    y_ref[11:13, :] = area
    y_ref[13:14, :] = x[10:11, :]    # o3[:,0]
    y_ref[14:15, :] = x[0:1, :]      # o1[:,0]
    y_ref[15:16, :] = x[5:6, :]      # o2[:,0]
    y_ref[16:18, :] = x[1:3, :]      # o1[:,1:3]
    y_ref[18:20, :] = x[6:8, :]      # o2[:,1:3]
    y_ref[20:22, :] = x[11:13, :]    # o3[:,1:3]


def l1_test_loss(outd1, outd2, outd3, label, d1annot, d2annot, d3annot,
                 *, lane_tile=4096):
    """Pallas implementation of L1TestLoss.forward. Returns (loss, out, label)."""
    assert lane_tile % 128 == 0, "lane_tile must be a multiple of 128"

    B, L, F = d1annot.shape
    N = B * L
    a1 = d1annot.reshape(N, F)
    a2 = d2annot.reshape(N, F)
    a3 = d3annot.reshape(N, F)
    label = jnp.reshape(label, (-1, 11))
    dtype = outd1.dtype

    # Pack six (N, 5) arrays into one lane-dense (30, Npad) array (single DMA
    # stream per grid step). Tile size adapts to N so small inputs are not
    # padded to a huge tile; large inputs get the full lane_tile.
    packed = jnp.concatenate([outd1, outd2, outd3, a1, a2, a3], axis=1).T  # (30, N)
    n128 = pl.cdiv(N, 128) * 128
    tile = min(lane_tile, n128)
    n_tiles = pl.cdiv(N, tile)
    n_pad = n_tiles * tile
    if n_pad != N:
        packed = jnp.pad(packed, ((0, 0), (0, n_pad - N)))

    y = pl.pallas_call(
        _l1_test_loss_kernel,
        out_shape=jax.ShapeDtypeStruct((_OUT_ROWS, n_pad), dtype),
        grid_spec=pltpu.PrefetchScalarGridSpec(
            num_scalar_prefetch=0,
            grid=(n_tiles,),
            in_specs=[pl.BlockSpec((_IN_ROWS, tile), lambda i: (0, i))],
            out_specs=pl.BlockSpec((_OUT_ROWS, tile), lambda i: (0, i)),
        ),
        compiler_params=pltpu.CompilerParams(
            dimension_semantics=("parallel",)),
    )(packed)

    loss = y[:11, :N].T   # (N, 11)
    out = y[11:, :N].T    # (N, 11)
    return loss, out, label


def _reference(outd1, outd2, outd3, label, d1annot, d2annot, d3annot):
    """Pure-JAX reference mirroring the PyTorch forward exactly."""
    B, L, _ = d1annot.shape
    a1 = d1annot.reshape(B * L, -1)
    a2 = d2annot.reshape(B * L, -1)
    a3 = d3annot.reshape(B * L, -1)
    label = jnp.reshape(label, (-1, 11))
    d1loss = jnp.abs(a1 - outd1)
    d2loss = jnp.abs(a2 - outd2)
    d3loss = jnp.abs(a3 - outd3)
    area = (outd1[:, 3:5] + outd2[:, 3:5] + outd3[:, 3:5]) / 3
    rwt = jnp.concatenate((outd1[:, 1:3], outd2[:, 1:3], outd3[:, 1:3]), 1)
    dims = jnp.concatenate((outd3[:, 0:1], outd1[:, 0:1], outd2[:, 0:1]), 1)
    out = jnp.concatenate((area, dims, rwt), 1)
    arealoss = jnp.abs(area - a1[:, 3:5])
    rwtloss = jnp.concatenate((d1loss[:, 1:3], d2loss[:, 1:3], d3loss[:, 1:3]), 1)
    dimsloss = jnp.concatenate((d1loss[:, 0:1], d2loss[:, 0:1], d3loss[:, 0:1]), 1)
    loss = jnp.concatenate((arealoss, dimsloss, rwtloss), 1)
    return loss, out, label


if __name__ == "__main__":
    key = jax.random.PRNGKey(0)
    B, L, F = 2, 8, 5          # N = B*L = 16 rows, 5 features per head
    N = B * L
    ks = jax.random.split(key, 7)
    outd1 = jax.random.normal(ks[0], (N, F), dtype=jnp.float32)
    outd2 = jax.random.normal(ks[1], (N, F), dtype=jnp.float32)
    outd3 = jax.random.normal(ks[2], (N, F), dtype=jnp.float32)
    label = jax.random.normal(ks[3], (B, L, 11), dtype=jnp.float32)
    d1annot = jax.random.normal(ks[4], (B, L, F), dtype=jnp.float32)
    d2annot = jax.random.normal(ks[5], (B, L, F), dtype=jnp.float32)
    d3annot = jax.random.normal(ks[6], (B, L, F), dtype=jnp.float32)

    loss, out, lab = l1_test_loss(outd1, outd2, outd3, label,
                                  d1annot, d2annot, d3annot)
    jax.block_until_ready((loss, out, lab))

    # sanity check against pure-JAX reference
    rl, ro, rlab = _reference(outd1, outd2, outd3, label,
                              d1annot, d2annot, d3annot)
    assert jnp.allclose(loss, rl, atol=1e-6)
    assert jnp.allclose(out, ro, atol=1e-6)
    assert jnp.allclose(lab, rlab)

    print("KERNEL_OK")
</pallas_src>

<mosaic_0001>
module attributes {stable_mosaic.version = 11 : i64} {
  func.func @_l1_test_loss_kernel(%arg0: i32, %arg1: memref<30x128xf32, #tpu.memory_space<vmem>>, %arg2: memref<22x128xf32, #tpu.memory_space<vmem>>) attributes {dimension_semantics = [#tpu.dimension_semantics<parallel>], iteration_bounds = array<i64: 1>, scalar_prefetch = 0 : i64, scratch_operands = 0 : i64, tpu.core_type = #tpu.core_type<tc>, window_params = [{transform_indices = @transform_0, window_bounds = array<i64: 30, 128>}, {transform_indices = @transform_1, window_bounds = array<i64: 22, 128>}]} {
    %c0 = arith.constant 0 : index
    %c0_0 = arith.constant 0 : index
    %0 = vector.load %arg1[%c0, %c0_0] : memref<30x128xf32, #tpu.memory_space<vmem>>, vector<30x128xf32>
    %1 = vector.extract_strided_slice %0 {offsets = [15, 0], sizes = [15, 128], strides = [1, 1]} : vector<30x128xf32> to vector<15x128xf32>
    %2 = vector.extract_strided_slice %0 {offsets = [0, 0], sizes = [15, 128], strides = [1, 1]} : vector<30x128xf32> to vector<15x128xf32>
    %3 = arith.subf %1, %2 : vector<15x128xf32>
    %4 = math.absf %3 : vector<15x128xf32>
    %5 = vector.extract_strided_slice %0 {offsets = [3, 0], sizes = [2, 128], strides = [1, 1]} : vector<30x128xf32> to vector<2x128xf32>
    %6 = vector.extract_strided_slice %0 {offsets = [8, 0], sizes = [2, 128], strides = [1, 1]} : vector<30x128xf32> to vector<2x128xf32>
    %7 = arith.addf %5, %6 : vector<2x128xf32>
    %8 = vector.extract_strided_slice %0 {offsets = [13, 0], sizes = [2, 128], strides = [1, 1]} : vector<30x128xf32> to vector<2x128xf32>
    %9 = arith.addf %7, %8 : vector<2x128xf32>
    %cst = arith.constant 0.333333343 : f32
    %10 = vector.broadcast %cst : f32 to vector<2x128xf32>
    %11 = arith.mulf %9, %10 : vector<2x128xf32>
    %12 = vector.extract_strided_slice %0 {offsets = [18, 0], sizes = [2, 128], strides = [1, 1]} : vector<30x128xf32> to vector<2x128xf32>
    %13 = arith.subf %11, %12 : vector<2x128xf32>
    %14 = math.absf %13 : vector<2x128xf32>
    %c0_1 = arith.constant 0 : index
    %c0_2 = arith.constant 0 : index
    %15 = vector.load %arg2[%c0_1, %c0_2] : memref<22x128xf32, #tpu.memory_space<vmem>>, vector<2x128xf32>
    tpu.vector_store %arg2[%c0_1, %c0_2], %14 {strides = array<i32>} : memref<22x128xf32, #tpu.memory_space<vmem>>, vector<2x128xf32>,
    %16 = vector.extract_strided_slice %4 {offsets = [0, 0], sizes = [1, 128], strides = [1, 1]} : vector<15x128xf32> to vector<1x128xf32>
    %c2 = arith.constant 2 : index
    %c0_3 = arith.constant 0 : index
    %17 = vector.load %arg2[%c2, %c0_3] : memref<22x128xf32, #tpu.memory_space<vmem>>, vector<1x128xf32>
    tpu.vector_store %arg2[%c2, %c0_3], %16 {strides = array<i32>} : memref<22x128xf32, #tpu.memory_space<vmem>>, vector<1x128xf32>,
    %18 = vector.extract_strided_slice %4 {offsets = [5, 0], sizes = [1, 128], strides = [1, 1]} : vector<15x128xf32> to vector<1x128xf32>
    %c3 = arith.constant 3 : index
    %c0_4 = arith.constant 0 : index
    %19 = vector.load %arg2[%c3, %c0_4] : memref<22x128xf32, #tpu.memory_space<vmem>>, vector<1x128xf32>
    tpu.vector_store %arg2[%c3, %c0_4], %18 {strides = array<i32>} : memref<22x128xf32, #tpu.memory_space<vmem>>, vector<1x128xf32>,
    %20 = vector.extract_strided_slice %4 {offsets = [10, 0], sizes = [1, 128], strides = [1, 1]} : vector<15x128xf32> to vector<1x128xf32>
    %c4 = arith.constant 4 : index
    %c0_5 = arith.constant 0 : index
    %21 = vector.load %arg2[%c4, %c0_5] : memref<22x128xf32, #tpu.memory_space<vmem>>, vector<1x128xf32>
    tpu.vector_store %arg2[%c4, %c0_5], %20 {strides = array<i32>} : memref<22x128xf32, #tpu.memory_space<vmem>>, vector<1x128xf32>,
    %22 = vector.extract_strided_slice %4 {offsets = [1, 0], sizes = [2, 128], strides = [1, 1]} : vector<15x128xf32> to vector<2x128xf32>
    %c5 = arith.constant 5 : index
    %c0_6 = arith.constant 0 : index
    %23 = vector.load %arg2[%c5, %c0_6] : memref<22x128xf32, #tpu.memory_space<vmem>>, vector<2x128xf32>
    tpu.vector_store %arg2[%c5, %c0_6], %22 {strides = array<i32>} : memref<22x128xf32, #tpu.memory_space<vmem>>, vector<2x128xf32>,
    %24 = vector.extract_strided_slice %4 {offsets = [6, 0], sizes = [2, 128], strides = [1, 1]} : vector<15x128xf32> to vector<2x128xf32>
    %c7 = arith.constant 7 : index
    %c0_7 = arith.constant 0 : index
    %25 = vector.load %arg2[%c7, %c0_7] : memref<22x128xf32, #tpu.memory_space<vmem>>, vector<2x128xf32>
    tpu.vector_store %arg2[%c7, %c0_7], %24 {strides = array<i32>} : memref<22x128xf32, #tpu.memory_space<vmem>>, vector<2x128xf32>,
    %26 = vector.extract_strided_slice %4 {offsets = [11, 0], sizes = [2, 128], strides = [1, 1]} : vector<15x128xf32> to vector<2x128xf32>
    %c9 = arith.constant 9 : index
    %c0_8 = arith.constant 0 : index
    %27 = vector.load %arg2[%c9, %c0_8] : memref<22x128xf32, #tpu.memory_space<vmem>>, vector<2x128xf32>
    tpu.vector_store %arg2[%c9, %c0_8], %26 {strides = array<i32>} : memref<22x128xf32, #tpu.memory_space<vmem>>, vector<2x128xf32>,
    %c11 = arith.constant 11 : index
    %c0_9 = arith.constant 0 : index
    %28 = vector.load %arg2[%c11, %c0_9] : memref<22x128xf32, #tpu.memory_space<vmem>>, vector<2x128xf32>
    tpu.vector_store %arg2[%c11, %c0_9], %11 {strides = array<i32>} : memref<22x128xf32, #tpu.memory_space<vmem>>, vector<2x128xf32>,
    %29 = vector.extract_strided_slice %0 {offsets = [10, 0], sizes = [1, 128], strides = [1, 1]} : vector<30x128xf32> to vector<1x128xf32>
    %c13 = arith.constant 13 : index
    %c0_10 = arith.constant 0 : index
    %30 = vector.load %arg2[%c13, %c0_10] : memref<22x128xf32, #tpu.memory_space<vmem>>, vector<1x128xf32>
    tpu.vector_store %arg2[%c13, %c0_10], %29 {strides = array<i32>} : memref<22x128xf32, #tpu.memory_space<vmem>>, vector<1x128xf32>,
    %31 = vector.extract_strided_slice %0 {offsets = [0, 0], sizes = [1, 128], strides = [1, 1]} : vector<30x128xf32> to vector<1x128xf32>
    %c14 = arith.constant 14 : index
    %c0_11 = arith.constant 0 : index
    %32 = vector.load %arg2[%c14, %c0_11] : memref<22x128xf32, #tpu.memory_space<vmem>>, vector<1x128xf32>
    tpu.vector_store %arg2[%c14, %c0_11], %31 {strides = array<i32>} : memref<22x128xf32, #tpu.memory_space<vmem>>, vector<1x128xf32>,
    %33 = vector.extract_strided_slice %0 {offsets = [5, 0], sizes = [1, 128], strides = [1, 1]} : vector<30x128xf32> to vector<1x128xf32>
    %c15 = arith.constant 15 : index
    %c0_12 = arith.constant 0 : index
    %34 = vector.load %arg2[%c15, %c0_12] : memref<22x128xf32, #tpu.memory_space<vmem>>, vector<1x128xf32>
    tpu.vector_store %arg2[%c15, %c0_12], %33 {strides = array<i32>} : memref<22x128xf32, #tpu.memory_space<vmem>>, vector<1x128xf32>,
    %35 = vector.extract_strided_slice %0 {offsets = [1, 0], sizes = [2, 128], strides = [1, 1]} : vector<30x128xf32> to vector<2x128xf32>
    %c16 = arith.constant 16 : index
    %c0_13 = arith.constant 0 : index
    %36 = vector.load %arg2[%c16, %c0_13] : memref<22x128xf32, #tpu.memory_space<vmem>>, vector<2x128xf32>
    tpu.vector_store %arg2[%c16, %c0_13], %35 {strides = array<i32>} : memref<22x128xf32, #tpu.memory_space<vmem>>, vector<2x128xf32>,
    %37 = vector.extract_strided_slice %0 {offsets = [6, 0], sizes = [2, 128], strides = [1, 1]} : vector<30x128xf32> to vector<2x128xf32>
    %c18 = arith.constant 18 : index
    %c0_14 = arith.constant 0 : index
    %38 = vector.load %arg2[%c18, %c0_14] : memref<22x128xf32, #tpu.memory_space<vmem>>, vector<2x128xf32>
    tpu.vector_store %arg2[%c18, %c0_14], %37 {strides = array<i32>} : memref<22x128xf32, #tpu.memory_space<vmem>>, vector<2x128xf32>,
    %39 = vector.extract_strided_slice %0 {offsets = [11, 0], sizes = [2, 128], strides = [1, 1]} : vector<30x128xf32> to vector<2x128xf32>
    %c20 = arith.constant 20 : index
    %c0_15 = arith.constant 0 : index
    %40 = vector.load %arg2[%c20, %c0_15] : memref<22x128xf32, #tpu.memory_space<vmem>>, vector<2x128xf32>
    tpu.vector_store %arg2[%c20, %c0_15], %39 {strides = array<i32>} : memref<22x128xf32, #tpu.memory_space<vmem>>, vector<2x128xf32>,
    return
  }
  func.func @transform_0(%arg0: i32) -> (i32, i32) {
    %c0_i32 = arith.constant 0 : i32
    %c0_i32_0 = arith.constant 0 : i32
    return %c0_i32, %arg0 : i32, i32
  }
  func.func @transform_1(%arg0: i32) -> (i32, i32) {
    %c0_i32 = arith.constant 0 : i32
    %c0_i32_0 = arith.constant 0 : i32
    return %c0_i32, %arg0 : i32, i32
  }
}

</mosaic_0001>

<llo_original>
// kernel: tpu_custom_call.1
$region0: #{tpu_custom_call.1}
  #allocation0 [shape = 'u32[]', space=smem, size = 0x4, offset = 0x4, fixed_abs, tag = 'smem constant byte address 0x4 - core index']
  #allocation1 [shape = 'u32[144,128]{1,0:T(1,128)}', space=vmem, size = 0x12000, scoped, tag = 'internal scratch']
  %s0 = inlined_call_operand.hbm [shape: f32[30,128], index: 0, kind: input, shape index: {}]
  %s1 = inlined_call_operand.hbm [shape: f32[22,128], index: 1, kind: output, shape index: {}]
  %s2 = sld [smem:[#allocation0]]
  $region18: #{tpu_custom_call.1} parent=0
    _
  %s4 = ssub.s32 1, %s2
  %s5 = scalar_select 0, %s4, %s2
  $region1: #{tpu_custom_call.1} parent=0
    #allocation2 [shape = 'u8[16384]{0}', space=vmem, size = 0x4000, scoped, tag = 'input window, operand 0, single buffered']
    #allocation3 [shape = 's32[1]{0}', space=sflag, size = 0x4, scoped, tag = 'scoped memory for tpu_custom_call.1']
    #allocation4 [shape = 's32[1]{0}', space=sflag, size = 0x4, scoped, tag = 'scoped memory for tpu_custom_call.1']
    #allocation5 [shape = 'u8[12288]{0}', space=vmem, size = 0x3000, scoped, tag = 'output window, operand 0, single buffered']
    %6 = vsyncpa [#allocation3], 0
    %7 = vsyncpa [#allocation4], 0
    // Predicated region
    $region2: #{tpu_custom_call.1} parent=1 // pred_check
      _
    $region3: #{tpu_custom_call.1} parent=1 // pred_check_branch
      %9 = sbr.rel (0) target = $region5
    $region4: #{tpu_custom_call.1} parent=1 // pred_region
      %s11 = ssub.s32 512, 512
      %12 = vsyncadd [#allocation3], %s11
      %s13 = sshll.u32 [#allocation2], 4
      %s14 = int_to_ptr.vmem [resolvable:$true] %s13
      %19 = dma.hbm_to_vmem [thread:$0]  %s0, 512, %s14, [#allocation3], 128, 128, 8
    $region5: #{tpu_custom_call.1} parent=1 // pred_fallthru
      _
    // Predicated region
    $region6: #{tpu_custom_call.1} parent=1 // pred_check
      _
    $region7: #{tpu_custom_call.1} parent=1 // pred_check_branch
      %21 = sbr.rel (0) target = $region9
    $region8: #{tpu_custom_call.1} parent=1 // pred_region
      %22 = dma.done [#allocation3], 512
    $region9: #{tpu_custom_call.1} parent=1 // pred_fallthru
      _
    %v23 = vld [vmem:[#allocation2] sm:$0xff]
    %v24 = vld [vmem:[#allocation2 + $0x8] sm:$0xff]
    %v25 = vld [vmem:[#allocation2 + $0x10] sm:$0xff]
    %v26 = vld [vmem:[#allocation2 + $0x18] sm:$0x3f]
    %vm29 = vcmask 1046528
    %v30 = vrot.slane %v23, 1
    %v31 = vrot.slane %v24, 1
    %v32 = vsel %vm29, %v30, %v31
    %v36 = vsub.f32 %v24, %v30
    %v37 = vsub.f32 %v25, %v32
    %v38 = vsub.f32 %v26, %v31
    %v39 = vand.u32 2147483647, %v36
    %v40 = vand.u32 2147483647, %v37
    %v41 = vand.u32 2147483647, %v38
    %v42 = vrot.slane %v24, 5
    %v44 = vadd.f32 %v23, %v42
    %v45 = vrot.slane %v24, 2
    %v47 = vadd.f32 %v44, %v45
    %v48 = vmul.f32 %v47, 0.33333334
    %v50 = vrot.slane %v25, 7
    %v52 = vsub.f32 %v48, %v50
    %v53 = vand.u32 2147483647, %v52
    %54 = vst [vmem:[#allocation5 - $0x3] sm:$0x18] %v53
    %55 = vst [vmem:[#allocation5 - $0x5] sm:$0x80] %v39
    %56 = vst [vmem:[#allocation5 - $0x1] sm:$0x10] %v40
    %57 = vst [vmem:[#allocation5 + $0x3] sm:$0x2] %v41
    %58 = vst [vmem:[#allocation5 + $0x5] sm:$0x3] %v40
    %59 = vst [vmem:[#allocation5 + $0x2] sm:$0x60] %v40
    %60 = vst [vmem:[#allocation5 + $0x7] sm:$0xc] %v41
    %61 = vst [vmem:[#allocation5 + $0x8] sm:$0x18] %v48
    %62 = vst [vmem:[#allocation5 + $0xb] sm:$0x4] %v24
    %63 = vst [vmem:[#allocation5 + $0xe] sm:$0x1] %v23
    %64 = vst [vmem:[#allocation5 + $0xa] sm:$0x20] %v23
    %65 = vst [vmem:[#allocation5 + $0xf] sm:$0x6] %v23
    %66 = vst [vmem:[#allocation5 + $0xc] sm:$0xc0] %v23
    %67 = vst [vmem:[#allocation5 + $0x11] sm:$0x18] %v24
    // Predicated region
    $region10: #{tpu_custom_call.1} parent=1 // pred_check
      _
    $region11: #{tpu_custom_call.1} parent=1 // pred_check_branch
      %69 = sbr.rel (0) target = $region13
    $region12: #{tpu_custom_call.1} parent=1 // pred_region
      %s71 = ssub.s32 384, 384
      %72 = vsyncadd [#allocation4], %s71
      %s73 = sshll.u32 [#allocation5], 4
      %s74 = int_to_ptr.vmem [resolvable:$true] %s73
      %79 = dma.vmem_to_hbm [thread:$0]  %s74, 384, %s1, [#allocation4], 128, 128, 8
    $region13: #{tpu_custom_call.1} parent=1 // pred_fallthru
      _
    // Predicated region
    $region14: #{tpu_custom_call.1} parent=1 // pred_check
      _
    $region15: #{tpu_custom_call.1} parent=1 // pred_check_branch
      %81 = sbr.rel (0) target = $region17
    $region16: #{tpu_custom_call.1} parent=1 // pred_region
      %82 = dma.done [#allocation4], 384
    $region17: #{tpu_custom_call.1} parent=1 // pred_fallthru
      _
    %83 = vsyncpa [#allocation3], 1
    %84 = vsyncpa [#allocation4], 1

</llo_original>
